<compile_context>
chip_gen: v6e
topology: v6e:2x2x1
jax: 0.10.0
libtpu: 0.0.40
codegen_flags: <defaults>
</compile_context>

<pallas_src>
import jax
import jax.numpy as jnp
from jax.experimental import pallas as pl
from jax.experimental.pallas import tpu as pltpu


def _encoder_lstm_kernel(x_ref, p_ref, out_ref):
    BP, H = out_ref.shape                  # padded batch rows, hidden size
    S = x_ref.shape[0] // BP               # number of timesteps (static)

    # ---- unpack the single parameter block (one DMA for all weights/biases) ----
    wc0 = p_ref[0:1, :]                                # (1, 4H) folded input weight, x coord
    wc1 = p_ref[1:2, :]                                # (1, 4H) folded input weight, y coord
    bc = p_ref[2:3, :]                                 # (1, 4H) folded bias
    whh = p_ref[8:8 + H, :].astype(jnp.bfloat16)       # (H, 4H) recurrent weight, bf16 MXU operand

    # ---- prologue: x-gates for every timestep, pure VPU (K=2 contraction as 2 FMAs) ----
    x = x_ref[...]                                     # (S*BP, 2) f32
    xg = x[:, 0:1] * wc0 + x[:, 1:2] * wc1 + bc        # (S*BP, 4H) f32, kept live in vregs

    # ---- serial recurrence, fully unrolled; only h @ W_hh touches the MXU ----
    h = jnp.zeros((BP, H), jnp.float32)
    c = jnp.zeros((BP, H), jnp.float32)
    for t in range(S):                                 # static Python unroll (S small)
        gates = xg[t * BP:(t + 1) * BP, :] + jnp.dot(
            h.astype(jnp.bfloat16), whh,
            preferred_element_type=jnp.float32)        # (BP, 4H) f32
        sig = jax.nn.sigmoid(gates)                    # one EUP pass over full 128-lane tile
        tah = jnp.tanh(gates)                          # one EUP pass
        i_g = sig[:, 0 * H:1 * H]
        f_g = sig[:, 1 * H:2 * H]
        g_g = tah[:, 2 * H:3 * H]
        o_g = sig[:, 3 * H:4 * H]
        c = f_g * c + i_g * g_g
        h = o_g * jnp.tanh(c)
        # TODO(synk): for long sequences, keep h in f32 for the recurrent matmul
        # (or validate bf16 drift) -- at S=8 the bf16 operand cast is within tolerance.

    out_ref[...] = h.astype(out_ref.dtype)


def fold_and_pack_params(params):
    """Offline fold of the spatial-embedding Linear into the LSTM input weights,
    packed into one lane-dense f32 block so the kernel needs only 2 input DMAs.

      rows 0..1  : W_comb = W_emb @ W_ih                  (2, 4H)
      row  2     : b_comb = b_emb @ W_ih + b_ih + b_hh    (1, 4H)
      rows 3..7  : zero padding (sublane alignment for W_hh)
      rows 8..   : W_hh                                   (H, 4H)
    """
    w_emb, b_emb, w_ih, w_hh, b_all = params
    H = w_hh.shape[0]
    hi = jax.lax.Precision.HIGHEST
    w_comb = jnp.dot(w_emb, w_ih, precision=hi, preferred_element_type=jnp.float32)
    b_comb = jnp.dot(b_emb, w_ih, precision=hi, preferred_element_type=jnp.float32) + b_all
    packed = jnp.zeros((8 + H, 4 * H), jnp.float32)
    packed = packed.at[0:2].set(w_comb)
    packed = packed.at[2:3].set(b_comb)
    packed = packed.at[8:].set(w_hh)
    return packed


def encoder_forward(obs_traj, packed_params):
    """obs_traj: (S, B, 2) float32.  Returns final_h: (num_layers=1, B, H)."""
    S, B, _ = obs_traj.shape
    H = packed_params.shape[0] - 8
    assert packed_params.shape[1] == 4 * H

    # Pad batch up to the 8-row sublane granule; padded rows are independent and dropped.
    BP = max(8, ((B + 7) // 8) * 8)
    if BP != B:
        obs_traj = jnp.pad(obs_traj, ((0, 0), (0, BP - B), (0, 0)))
    x = obs_traj.reshape(S * BP, 2)            # mirrors .contiguous().view(-1, 2)

    vmem = pl.BlockSpec(memory_space=pltpu.MemorySpace.VMEM)

    h_full = pl.pallas_call(
        _encoder_lstm_kernel,
        out_shape=jax.ShapeDtypeStruct((BP, H), jnp.float32),
        in_specs=[vmem, vmem],
        out_specs=vmem,
    )(x, packed_params)

    return h_full[None, :B, :]                 # (num_layers=1, B, H)


def make_params(key, embedding_dim, h_dim):
    """Deterministic synthetic parameters (shapes match nn.Linear(2,E) + nn.LSTM(E,H,1))."""
    k = jax.random.split(key, 6)
    scale = 0.2
    # nn.Linear(2, E): weight (E, 2), bias (E,)  -> stored transposed (2, E), (1, E)
    w_emb = scale * jax.random.normal(k[0], (2, embedding_dim), jnp.float32)
    b_emb = scale * jax.random.normal(k[1], (1, embedding_dim), jnp.float32)
    # nn.LSTM: weight_ih (4H, E), weight_hh (4H, H), bias_ih (4H,), bias_hh (4H,)
    # stored transposed for (B,K)@(K,N); biases pre-summed.
    w_ih = scale * jax.random.normal(k[2], (embedding_dim, 4 * h_dim), jnp.float32)
    w_hh = scale * jax.random.normal(k[3], (h_dim, 4 * h_dim), jnp.float32)
    b_ih = scale * jax.random.normal(k[4], (4 * h_dim,), jnp.float32)
    b_hh = scale * jax.random.normal(k[5], (4 * h_dim,), jnp.float32)
    b_all = (b_ih + b_hh)[None, :]
    return (w_emb, b_emb, w_ih, w_hh, b_all)


def encoder_reference(obs_traj, params, mirror_kernel=False):
    """Pure-JAX reference (nn.LSTM gate order i,f,g,o).

    mirror_kernel=True  : folded input weights, f32 VPU x-gates, bf16-operand
                          recurrent matmul with f32 accumulation (kernel numerics).
    mirror_kernel=False : straight fp32 (PyTorch-like) computation.
    """
    w_emb, b_emb, w_ih, w_hh, b_all = params
    S, B, _ = obs_traj.shape
    H = w_hh.shape[0]
    hi = jax.lax.Precision.HIGHEST

    if mirror_kernel:
        w_comb = jnp.dot(w_emb, w_ih, precision=hi, preferred_element_type=jnp.float32)
        b_comb = jnp.dot(b_emb, w_ih, precision=hi, preferred_element_type=jnp.float32) + b_all
        xf = obs_traj.reshape(-1, 2)
        x_gates = xf[:, 0:1] * w_comb[0:1] + xf[:, 1:2] * w_comb[1:2] + b_comb

        def mm(a, b):
            return jnp.dot(a.astype(jnp.bfloat16), b.astype(jnp.bfloat16),
                           preferred_element_type=jnp.float32)
    else:
        x_emb = jnp.dot(obs_traj.reshape(-1, 2), w_emb, precision=hi,
                        preferred_element_type=jnp.float32) + b_emb
        x_gates = jnp.dot(x_emb, w_ih, precision=hi,
                          preferred_element_type=jnp.float32) + b_all

        def mm(a, b):
            return jnp.dot(a, b, precision=hi, preferred_element_type=jnp.float32)

    x_gates = x_gates.reshape(S, B, 4 * H)

    def step(carry, xg_t):
        h, c = carry
        gates = xg_t + mm(h, w_hh)
        i = jax.nn.sigmoid(gates[:, 0 * H:1 * H])
        f = jax.nn.sigmoid(gates[:, 1 * H:2 * H])
        g = jnp.tanh(gates[:, 2 * H:3 * H])
        o = jax.nn.sigmoid(gates[:, 3 * H:4 * H])
        c_new = f * c + i * g
        h_new = o * jnp.tanh(c_new)
        return (h_new, c_new), None

    z = jnp.zeros((B, H), jnp.float32)
    (h_fin, _), _ = jax.lax.scan(step, (z, z), x_gates)
    return h_fin[None]


if __name__ == "__main__":
    # Small shapes consistent with the module: seq=8, batch=4, E=32, H=32.
    S, B, E, H = 8, 4, 32, 32
    key = jax.random.PRNGKey(0)
    k_traj, k_params = jax.random.split(key)

    obs_traj = jax.random.normal(k_traj, (S, B, 2), jnp.float32)   # (seq, batch, 2)
    params = make_params(k_params, E, H)
    packed_params = fold_and_pack_params(params)                   # offline fold + pack

    final_h = jax.block_until_ready(encoder_forward(obs_traj, packed_params))
    assert final_h.shape == (1, B, H)

    ref_mirror = encoder_reference(obs_traj, params, mirror_kernel=True)   # kernel numerics
    ref_fp32 = encoder_reference(obs_traj, params, mirror_kernel=False)    # PyTorch-like fp32
    assert jnp.allclose(final_h, ref_mirror, atol=1e-2, rtol=1e-2), "mismatch vs kernel-numerics reference"
    assert jnp.allclose(final_h, ref_fp32, atol=5e-2, rtol=5e-2), "drift vs fp32 reference"

    print("KERNEL_OK")
</pallas_src>

<mosaic_0001>
module attributes {stable_mosaic.version = 11 : i64} {
  func.func @_encoder_lstm_kernel(%arg0: memref<64x2xf32, #tpu.memory_space<vmem>>, %arg1: memref<40x128xf32, #tpu.memory_space<vmem>>, %arg2: memref<8x32xf32, #tpu.memory_space<vmem>>) attributes {dimension_semantics = [], scalar_prefetch = 0 : i64, scratch_operands = 0 : i64, tpu.core_type = #tpu.core_type<tc>} {
    %c0 = arith.constant 0 : index
    %c0_0 = arith.constant 0 : index
    %0 = vector.load %arg1[%c0, %c0_0] : memref<40x128xf32, #tpu.memory_space<vmem>>, vector<1x128xf32>
    %c1 = arith.constant 1 : index
    %c0_1 = arith.constant 0 : index
    %1 = vector.load %arg1[%c1, %c0_1] : memref<40x128xf32, #tpu.memory_space<vmem>>, vector<1x128xf32>
    %c2 = arith.constant 2 : index
    %c0_2 = arith.constant 0 : index
    %2 = vector.load %arg1[%c2, %c0_2] : memref<40x128xf32, #tpu.memory_space<vmem>>, vector<1x128xf32>
    %c8 = arith.constant 8 : index
    %c0_3 = arith.constant 0 : index
    %3 = vector.load %arg1[%c8, %c0_3] : memref<40x128xf32, #tpu.memory_space<vmem>>, vector<32x128xf32>
    %4 = arith.truncf %3 : vector<32x128xf32> to vector<32x128xbf16>
    %c0_4 = arith.constant 0 : index
    %c0_5 = arith.constant 0 : index
    %5 = vector.load %arg0[%c0_4, %c0_5] : memref<64x2xf32, #tpu.memory_space<vmem>>, vector<64x2xf32>
    %6 = vector.extract_strided_slice %5 {offsets = [0, 0], sizes = [64, 1], strides = [1, 1]} : vector<64x2xf32> to vector<64x1xf32>
    %7 = vector.broadcast %6 : vector<64x1xf32> to vector<64x128xf32>
    %8 = vector.broadcast %0 : vector<1x128xf32> to vector<64x128xf32>
    %9 = arith.mulf %7, %8 : vector<64x128xf32>
    %10 = vector.extract_strided_slice %5 {offsets = [0, 1], sizes = [64, 1], strides = [1, 1]} : vector<64x2xf32> to vector<64x1xf32>
    %11 = vector.broadcast %10 : vector<64x1xf32> to vector<64x128xf32>
    %12 = vector.broadcast %1 : vector<1x128xf32> to vector<64x128xf32>
    %13 = arith.mulf %11, %12 : vector<64x128xf32>
    %14 = arith.addf %9, %13 : vector<64x128xf32>
    %15 = vector.broadcast %2 : vector<1x128xf32> to vector<64x128xf32>
    %16 = arith.addf %14, %15 : vector<64x128xf32>
    %cst = arith.constant 0.000000e+00 : f32
    %17 = vector.broadcast %cst : f32 to vector<8x32xf32>
    %cst_6 = arith.constant 0.000000e+00 : f32
    %18 = vector.broadcast %cst_6 : f32 to vector<8x32xf32>
    %19 = vector.extract_strided_slice %16 {offsets = [0, 0], sizes = [8, 128], strides = [1, 1]} : vector<64x128xf32> to vector<8x128xf32>
    %20 = arith.truncf %17 : vector<8x32xf32> to vector<8x32xbf16>
    %cst_7 = arith.constant dense<0.000000e+00> : vector<8x128xf32>
    %21 = tpu.matmul %20, %4, %cst_7 {dimension_numbers = #tpu.dot_dimension_numbers<[1], [0], [0], [1], [0, 0, 1, 1], [], []>} : vector<8x32xbf16>, vector<32x128xbf16>, vector<8x128xf32> -> vector<8x128xf32>
    %22 = arith.addf %19, %21 : vector<8x128xf32>
    %23 = arith.negf %22 : vector<8x128xf32>
    %24 = math.exp %23 : vector<8x128xf32>
    %cst_8 = arith.constant 1.000000e+00 : f32
    %25 = vector.broadcast %cst_8 : f32 to vector<8x128xf32>
    %26 = arith.addf %25, %24 : vector<8x128xf32>
    %27 = arith.divf %25, %26 : vector<8x128xf32>
    %28 = math.tanh %22 : vector<8x128xf32>
    %29 = vector.extract_strided_slice %27 {offsets = [0, 0], sizes = [8, 32], strides = [1, 1]} : vector<8x128xf32> to vector<8x32xf32>
    %30 = vector.extract_strided_slice %27 {offsets = [0, 32], sizes = [8, 32], strides = [1, 1]} : vector<8x128xf32> to vector<8x32xf32>
    %31 = vector.extract_strided_slice %28 {offsets = [0, 64], sizes = [8, 32], strides = [1, 1]} : vector<8x128xf32> to vector<8x32xf32>
    %32 = vector.extract_strided_slice %27 {offsets = [0, 96], sizes = [8, 32], strides = [1, 1]} : vector<8x128xf32> to vector<8x32xf32>
    %33 = arith.mulf %30, %18 : vector<8x32xf32>
    %34 = arith.mulf %29, %31 : vector<8x32xf32>
    %35 = arith.addf %33, %34 : vector<8x32xf32>
    %36 = math.tanh %35 : vector<8x32xf32>
    %37 = arith.mulf %32, %36 : vector<8x32xf32>
    %38 = vector.extract_strided_slice %16 {offsets = [8, 0], sizes = [8, 128], strides = [1, 1]} : vector<64x128xf32> to vector<8x128xf32>
    %39 = arith.truncf %37 : vector<8x32xf32> to vector<8x32xbf16>
    %cst_9 = arith.constant dense<0.000000e+00> : vector<8x128xf32>
    %40 = tpu.matmul %39, %4, %cst_9 {dimension_numbers = #tpu.dot_dimension_numbers<[1], [0], [0], [1], [0, 0, 1, 1], [], []>} : vector<8x32xbf16>, vector<32x128xbf16>, vector<8x128xf32> -> vector<8x128xf32>
    %41 = arith.addf %38, %40 : vector<8x128xf32>
    %42 = arith.negf %41 : vector<8x128xf32>
    %43 = math.exp %42 : vector<8x128xf32>
    %cst_10 = arith.constant 1.000000e+00 : f32
    %44 = vector.broadcast %cst_10 : f32 to vector<8x128xf32>
    %45 = arith.addf %44, %43 : vector<8x128xf32>
    %46 = arith.divf %44, %45 : vector<8x128xf32>
    %47 = math.tanh %41 : vector<8x128xf32>
    %48 = vector.extract_strided_slice %46 {offsets = [0, 0], sizes = [8, 32], strides = [1, 1]} : vector<8x128xf32> to vector<8x32xf32>
    %49 = vector.extract_strided_slice %46 {offsets = [0, 32], sizes = [8, 32], strides = [1, 1]} : vector<8x128xf32> to vector<8x32xf32>
    %50 = vector.extract_strided_slice %47 {offsets = [0, 64], sizes = [8, 32], strides = [1, 1]} : vector<8x128xf32> to vector<8x32xf32>
    %51 = vector.extract_strided_slice %46 {offsets = [0, 96], sizes = [8, 32], strides = [1, 1]} : vector<8x128xf32> to vector<8x32xf32>
    %52 = arith.mulf %49, %35 : vector<8x32xf32>
    %53 = arith.mulf %48, %50 : vector<8x32xf32>
    %54 = arith.addf %52, %53 : vector<8x32xf32>
    %55 = math.tanh %54 : vector<8x32xf32>
    %56 = arith.mulf %51, %55 : vector<8x32xf32>
    %57 = vector.extract_strided_slice %16 {offsets = [16, 0], sizes = [8, 128], strides = [1, 1]} : vector<64x128xf32> to vector<8x128xf32>
    %58 = arith.truncf %56 : vector<8x32xf32> to vector<8x32xbf16>
    %cst_11 = arith.constant dense<0.000000e+00> : vector<8x128xf32>
    %59 = tpu.matmul %58, %4, %cst_11 {dimension_numbers = #tpu.dot_dimension_numbers<[1], [0], [0], [1], [0, 0, 1, 1], [], []>} : vector<8x32xbf16>, vector<32x128xbf16>, vector<8x128xf32> -> vector<8x128xf32>
    %60 = arith.addf %57, %59 : vector<8x128xf32>
    %61 = arith.negf %60 : vector<8x128xf32>
    %62 = math.exp %61 : vector<8x128xf32>
    %cst_12 = arith.constant 1.000000e+00 : f32
    %63 = vector.broadcast %cst_12 : f32 to vector<8x128xf32>
    %64 = arith.addf %63, %62 : vector<8x128xf32>
    %65 = arith.divf %63, %64 : vector<8x128xf32>
    %66 = math.tanh %60 : vector<8x128xf32>
    %67 = vector.extract_strided_slice %65 {offsets = [0, 0], sizes = [8, 32], strides = [1, 1]} : vector<8x128xf32> to vector<8x32xf32>
    %68 = vector.extract_strided_slice %65 {offsets = [0, 32], sizes = [8, 32], strides = [1, 1]} : vector<8x128xf32> to vector<8x32xf32>
    %69 = vector.extract_strided_slice %66 {offsets = [0, 64], sizes = [8, 32], strides = [1, 1]} : vector<8x128xf32> to vector<8x32xf32>
    %70 = vector.extract_strided_slice %65 {offsets = [0, 96], sizes = [8, 32], strides = [1, 1]} : vector<8x128xf32> to vector<8x32xf32>
    %71 = arith.mulf %68, %54 : vector<8x32xf32>
    %72 = arith.mulf %67, %69 : vector<8x32xf32>
    %73 = arith.addf %71, %72 : vector<8x32xf32>
    %74 = math.tanh %73 : vector<8x32xf32>
    %75 = arith.mulf %70, %74 : vector<8x32xf32>
    %76 = vector.extract_strided_slice %16 {offsets = [24, 0], sizes = [8, 128], strides = [1, 1]} : vector<64x128xf32> to vector<8x128xf32>
    %77 = arith.truncf %75 : vector<8x32xf32> to vector<8x32xbf16>
    %cst_13 = arith.constant dense<0.000000e+00> : vector<8x128xf32>
    %78 = tpu.matmul %77, %4, %cst_13 {dimension_numbers = #tpu.dot_dimension_numbers<[1], [0], [0], [1], [0, 0, 1, 1], [], []>} : vector<8x32xbf16>, vector<32x128xbf16>, vector<8x128xf32> -> vector<8x128xf32>
    %79 = arith.addf %76, %78 : vector<8x128xf32>
    %80 = arith.negf %79 : vector<8x128xf32>
    %81 = math.exp %80 : vector<8x128xf32>
    %cst_14 = arith.constant 1.000000e+00 : f32
    %82 = vector.broadcast %cst_14 : f32 to vector<8x128xf32>
    %83 = arith.addf %82, %81 : vector<8x128xf32>
    %84 = arith.divf %82, %83 : vector<8x128xf32>
    %85 = math.tanh %79 : vector<8x128xf32>
    %86 = vector.extract_strided_slice %84 {offsets = [0, 0], sizes = [8, 32], strides = [1, 1]} : vector<8x128xf32> to vector<8x32xf32>
    %87 = vector.extract_strided_slice %84 {offsets = [0, 32], sizes = [8, 32], strides = [1, 1]} : vector<8x128xf32> to vector<8x32xf32>
    %88 = vector.extract_strided_slice %85 {offsets = [0, 64], sizes = [8, 32], strides = [1, 1]} : vector<8x128xf32> to vector<8x32xf32>
    %89 = vector.extract_strided_slice %84 {offsets = [0, 96], sizes = [8, 32], strides = [1, 1]} : vector<8x128xf32> to vector<8x32xf32>
    %90 = arith.mulf %87, %73 : vector<8x32xf32>
    %91 = arith.mulf %86, %88 : vector<8x32xf32>
    %92 = arith.addf %90, %91 : vector<8x32xf32>
    %93 = math.tanh %92 : vector<8x32xf32>
    %94 = arith.mulf %89, %93 : vector<8x32xf32>
    %95 = vector.extract_strided_slice %16 {offsets = [32, 0], sizes = [8, 128], strides = [1, 1]} : vector<64x128xf32> to vector<8x128xf32>
    %96 = arith.truncf %94 : vector<8x32xf32> to vector<8x32xbf16>
    %cst_15 = arith.constant dense<0.000000e+00> : vector<8x128xf32>
    %97 = tpu.matmul %96, %4, %cst_15 {dimension_numbers = #tpu.dot_dimension_numbers<[1], [0], [0], [1], [0, 0, 1, 1], [], []>} : vector<8x32xbf16>, vector<32x128xbf16>, vector<8x128xf32> -> vector<8x128xf32>
    %98 = arith.addf %95, %97 : vector<8x128xf32>
    %99 = arith.negf %98 : vector<8x128xf32>
    %100 = math.exp %99 : vector<8x128xf32>
    %cst_16 = arith.constant 1.000000e+00 : f32
    %101 = vector.broadcast %cst_16 : f32 to vector<8x128xf32>
    %102 = arith.addf %101, %100 : vector<8x128xf32>
    %103 = arith.divf %101, %102 : vector<8x128xf32>
    %104 = math.tanh %98 : vector<8x128xf32>
    %105 = vector.extract_strided_slice %103 {offsets = [0, 0], sizes = [8, 32], strides = [1, 1]} : vector<8x128xf32> to vector<8x32xf32>
    %106 = vector.extract_strided_slice %103 {offsets = [0, 32], sizes = [8, 32], strides = [1, 1]} : vector<8x128xf32> to vector<8x32xf32>
    %107 = vector.extract_strided_slice %104 {offsets = [0, 64], sizes = [8, 32], strides = [1, 1]} : vector<8x128xf32> to vector<8x32xf32>
    %108 = vector.extract_strided_slice %103 {offsets = [0, 96], sizes = [8, 32], strides = [1, 1]} : vector<8x128xf32> to vector<8x32xf32>
    %109 = arith.mulf %106, %92 : vector<8x32xf32>
    %110 = arith.mulf %105, %107 : vector<8x32xf32>
    %111 = arith.addf %109, %110 : vector<8x32xf32>
    %112 = math.tanh %111 : vector<8x32xf32>
    %113 = arith.mulf %108, %112 : vector<8x32xf32>
    %114 = vector.extract_strided_slice %16 {offsets = [40, 0], sizes = [8, 128], strides = [1, 1]} : vector<64x128xf32> to vector<8x128xf32>
    %115 = arith.truncf %113 : vector<8x32xf32> to vector<8x32xbf16>
    %cst_17 = arith.constant dense<0.000000e+00> : vector<8x128xf32>
    %116 = tpu.matmul %115, %4, %cst_17 {dimension_numbers = #tpu.dot_dimension_numbers<[1], [0], [0], [1], [0, 0, 1, 1], [], []>} : vector<8x32xbf16>, vector<32x128xbf16>, vector<8x128xf32> -> vector<8x128xf32>
    %117 = arith.addf %114, %116 : vector<8x128xf32>
    %118 = arith.negf %117 : vector<8x128xf32>
    %119 = math.exp %118 : vector<8x128xf32>
    %cst_18 = arith.constant 1.000000e+00 : f32
    %120 = vector.broadcast %cst_18 : f32 to vector<8x128xf32>
    %121 = arith.addf %120, %119 : vector<8x128xf32>
    %122 = arith.divf %120, %121 : vector<8x128xf32>
    %123 = math.tanh %117 : vector<8x128xf32>
    %124 = vector.extract_strided_slice %122 {offsets = [0, 0], sizes = [8, 32], strides = [1, 1]} : vector<8x128xf32> to vector<8x32xf32>
    %125 = vector.extract_strided_slice %122 {offsets = [0, 32], sizes = [8, 32], strides = [1, 1]} : vector<8x128xf32> to vector<8x32xf32>
    %126 = vector.extract_strided_slice %123 {offsets = [0, 64], sizes = [8, 32], strides = [1, 1]} : vector<8x128xf32> to vector<8x32xf32>
    %127 = vector.extract_strided_slice %122 {offsets = [0, 96], sizes = [8, 32], strides = [1, 1]} : vector<8x128xf32> to vector<8x32xf32>
    %128 = arith.mulf %125, %111 : vector<8x32xf32>
    %129 = arith.mulf %124, %126 : vector<8x32xf32>
    %130 = arith.addf %128, %129 : vector<8x32xf32>
    %131 = math.tanh %130 : vector<8x32xf32>
    %132 = arith.mulf %127, %131 : vector<8x32xf32>
    %133 = vector.extract_strided_slice %16 {offsets = [48, 0], sizes = [8, 128], strides = [1, 1]} : vector<64x128xf32> to vector<8x128xf32>
    %134 = arith.truncf %132 : vector<8x32xf32> to vector<8x32xbf16>
    %cst_19 = arith.constant dense<0.000000e+00> : vector<8x128xf32>
    %135 = tpu.matmul %134, %4, %cst_19 {dimension_numbers = #tpu.dot_dimension_numbers<[1], [0], [0], [1], [0, 0, 1, 1], [], []>} : vector<8x32xbf16>, vector<32x128xbf16>, vector<8x128xf32> -> vector<8x128xf32>
    %136 = arith.addf %133, %135 : vector<8x128xf32>
    %137 = arith.negf %136 : vector<8x128xf32>
    %138 = math.exp %137 : vector<8x128xf32>
    %cst_20 = arith.constant 1.000000e+00 : f32
    %139 = vector.broadcast %cst_20 : f32 to vector<8x128xf32>
    %140 = arith.addf %139, %138 : vector<8x128xf32>
    %141 = arith.divf %139, %140 : vector<8x128xf32>
    %142 = math.tanh %136 : vector<8x128xf32>
    %143 = vector.extract_strided_slice %141 {offsets = [0, 0], sizes = [8, 32], strides = [1, 1]} : vector<8x128xf32> to vector<8x32xf32>
    %144 = vector.extract_strided_slice %141 {offsets = [0, 32], sizes = [8, 32], strides = [1, 1]} : vector<8x128xf32> to vector<8x32xf32>
    %145 = vector.extract_strided_slice %142 {offsets = [0, 64], sizes = [8, 32], strides = [1, 1]} : vector<8x128xf32> to vector<8x32xf32>
    %146 = vector.extract_strided_slice %141 {offsets = [0, 96], sizes = [8, 32], strides = [1, 1]} : vector<8x128xf32> to vector<8x32xf32>
    %147 = arith.mulf %144, %130 : vector<8x32xf32>
    %148 = arith.mulf %143, %145 : vector<8x32xf32>
    %149 = arith.addf %147, %148 : vector<8x32xf32>
    %150 = math.tanh %149 : vector<8x32xf32>
    %151 = arith.mulf %146, %150 : vector<8x32xf32>
    %152 = vector.extract_strided_slice %16 {offsets = [56, 0], sizes = [8, 128], strides = [1, 1]} : vector<64x128xf32> to vector<8x128xf32>
    %153 = arith.truncf %151 : vector<8x32xf32> to vector<8x32xbf16>
    %cst_21 = arith.constant dense<0.000000e+00> : vector<8x128xf32>
    %154 = tpu.matmul %153, %4, %cst_21 {dimension_numbers = #tpu.dot_dimension_numbers<[1], [0], [0], [1], [0, 0, 1, 1], [], []>} : vector<8x32xbf16>, vector<32x128xbf16>, vector<8x128xf32> -> vector<8x128xf32>
    %155 = arith.addf %152, %154 : vector<8x128xf32>
    %156 = arith.negf %155 : vector<8x128xf32>
    %157 = math.exp %156 : vector<8x128xf32>
    %cst_22 = arith.constant 1.000000e+00 : f32
    %158 = vector.broadcast %cst_22 : f32 to vector<8x128xf32>
    %159 = arith.addf %158, %157 : vector<8x128xf32>
    %160 = arith.divf %158, %159 : vector<8x128xf32>
    %161 = math.tanh %155 : vector<8x128xf32>
    %162 = vector.extract_strided_slice %160 {offsets = [0, 0], sizes = [8, 32], strides = [1, 1]} : vector<8x128xf32> to vector<8x32xf32>
    %163 = vector.extract_strided_slice %160 {offsets = [0, 32], sizes = [8, 32], strides = [1, 1]} : vector<8x128xf32> to vector<8x32xf32>
    %164 = vector.extract_strided_slice %161 {offsets = [0, 64], sizes = [8, 32], strides = [1, 1]} : vector<8x128xf32> to vector<8x32xf32>
    %165 = vector.extract_strided_slice %160 {offsets = [0, 96], sizes = [8, 32], strides = [1, 1]} : vector<8x128xf32> to vector<8x32xf32>
    %166 = arith.mulf %163, %149 : vector<8x32xf32>
    %167 = arith.mulf %162, %164 : vector<8x32xf32>
    %168 = arith.addf %166, %167 : vector<8x32xf32>
    %169 = math.tanh %168 : vector<8x32xf32>
    %170 = arith.mulf %165, %169 : vector<8x32xf32>
    %c0_23 = arith.constant 0 : index
    %c0_24 = arith.constant 0 : index
    %171 = vector.load %arg2[%c0_23, %c0_24] : memref<8x32xf32, #tpu.memory_space<vmem>>, vector<8x32xf32>
    tpu.vector_store %arg2[%c0_23, %c0_24], %170 {strides = array<i32>} : memref<8x32xf32, #tpu.memory_space<vmem>>, vector<8x32xf32>,
    return
  }
}

</mosaic_0001>

<llo_original>
// kernel: tpu_custom_call.1
$region0: #{tpu_custom_call.1}
  #allocation0 [shape = 'u32[]', space=smem, size = 0x4, offset = 0x4, fixed_abs, tag = 'smem constant byte address 0x4 - core index']
  #allocation1 [shape = 'u32[144,128]{1,0:T(1,128)}', space=vmem, size = 0x12000, scoped, tag = 'internal scratch']
  %s0 = inlined_call_operand.vmem [shape: f32[64,2], index: 0, kind: input, shape index: {}]
  %s1 = inlined_call_operand.vmem [shape: f32[40,128], index: 1, kind: input, shape index: {}]
  %s2 = inlined_call_operand.hbm [shape: f32[8,32], index: 2, kind: output, shape index: {}]
  %s3 = sld [smem:[#allocation0]]
  $region18: #{tpu_custom_call.1} parent=0
    _
  %s5 = ssub.s32 1, %s3
  %s6 = scalar_select 0, %s5, %s3
  $region1: #{tpu_custom_call.1} parent=0
    #allocation2 [shape = 'u8[4096]{0}', space=vmem, size = 0x1000, scoped, tag = 'output window, operand 0, single buffered']
    #allocation3 [shape = 's32[1]{0}', space=sflag, size = 0x4, scoped, tag = 'scoped memory for tpu_custom_call.1']
    %7 = vsyncpa [#allocation3], 0
    // Predicated region
    $region2: #{tpu_custom_call.1} parent=1 // pred_check
      _
    $region3: #{tpu_custom_call.1} parent=1 // pred_check_branch
      %9 = sbr.rel (0) target = $region5
    $region4: #{tpu_custom_call.1} parent=1 // pred_region
      _
    $region5: #{tpu_custom_call.1} parent=1 // pred_fallthru
      _
    // Predicated region
    $region6: #{tpu_custom_call.1} parent=1 // pred_check
      _
    $region7: #{tpu_custom_call.1} parent=1 // pred_check_branch
      %11 = sbr.rel (0) target = $region9
    $region8: #{tpu_custom_call.1} parent=1 // pred_region
      _
    $region9: #{tpu_custom_call.1} parent=1 // pred_fallthru
      _
    %v13 = vld [vmem:[%s1] sm:$0x1]
    %v14 = vld [vmem:[%s1 + $0x1] sm:$0x1]
    %v15 = vld [vmem:[%s1 + $0x2] sm:$0x1]
    %v16 = vld [vmem:[%s1 + $0x8] sm:$0xff]
    %v17 = vld [vmem:[%s1 + $0x10] sm:$0xff]
    %v18 = vld [vmem:[%s1 + $0x18] sm:$0xff]
    %v19 = vld [vmem:[%s1 + $0x20] sm:$0xff]
    %v20 = vpack.c.bf16 %v17, %v16
    %v21 = vpack.c.bf16 %v19, %v18
    %v22 = vld [vmem:[%s0] sm:$0xff]
    %v23 = vld [vmem:[%s0 + $0x8] sm:$0xff]
    %v24 = vld [vmem:[%s0 + $0x10] sm:$0xff]
    %v25 = vld [vmem:[%s0 + $0x18] sm:$0xff]
    %v26 = vld [vmem:[%s0 + $0x20] sm:$0xff]
    %v27 = vld [vmem:[%s0 + $0x28] sm:$0xff]
    %v28 = vld [vmem:[%s0 + $0x30] sm:$0xff]
    %v29 = vld [vmem:[%s0 + $0x38] sm:$0xff]
    %31 = vset.pattern.permute.xlu0 0
    %32 = vperm.xlu0 %31, %v22
    %v33 = vpop.permute.xlu0 %32
    %36 = vset.pattern.permute.xlu0 0
    %37 = vperm.xlu0 %36, %v23
    %v38 = vpop.permute.xlu0 %37
    %41 = vset.pattern.permute.xlu0 0
    %42 = vperm.xlu0 %41, %v24
    %v43 = vpop.permute.xlu0 %42
    %46 = vset.pattern.permute.xlu0 0
    %47 = vperm.xlu0 %46, %v25
    %v48 = vpop.permute.xlu0 %47
    %51 = vset.pattern.permute.xlu0 0
    %52 = vperm.xlu0 %51, %v26
    %v53 = vpop.permute.xlu0 %52
    %56 = vset.pattern.permute.xlu0 0
    %57 = vperm.xlu0 %56, %v27
    %v58 = vpop.permute.xlu0 %57
    %61 = vset.pattern.permute.xlu0 0
    %62 = vperm.xlu0 %61, %v28
    %v63 = vpop.permute.xlu0 %62
    %66 = vset.pattern.permute.xlu0 0
    %67 = vperm.xlu0 %66, %v29
    %v68 = vpop.permute.xlu0 %67
    %v70 = vlaneseq
    %v71 = vshrl.u32 %v70, 7
    %v72 = vsub.s32 0, %v71
    %v73 = vrot.slane %v13, %v72
    %v74 = vmul.f32 %v33, %v73
    %v75 = vmul.f32 %v38, %v73
    %v76 = vmul.f32 %v43, %v73
    %v77 = vmul.f32 %v48, %v73
    %v78 = vmul.f32 %v53, %v73
    %v79 = vmul.f32 %v58, %v73
    %v80 = vmul.f32 %v63, %v73
    %v81 = vmul.f32 %v68, %v73
    %82 = vset.pattern.permute.xlu0 1
    %83 = vperm.xlu0 %82, %v22
    %v84 = vpop.permute.xlu0 %83
    %86 = vset.pattern.permute.xlu0 1
    %87 = vperm.xlu0 %86, %v23
    %v88 = vpop.permute.xlu0 %87
    %90 = vset.pattern.permute.xlu0 1
    %91 = vperm.xlu0 %90, %v24
    %v92 = vpop.permute.xlu0 %91
    %94 = vset.pattern.permute.xlu0 1
    %95 = vperm.xlu0 %94, %v25
    %v96 = vpop.permute.xlu0 %95
    %98 = vset.pattern.permute.xlu0 1
    %99 = vperm.xlu0 %98, %v26
    %v100 = vpop.permute.xlu0 %99
    %102 = vset.pattern.permute.xlu0 1
    %103 = vperm.xlu0 %102, %v27
    %v104 = vpop.permute.xlu0 %103
    %106 = vset.pattern.permute.xlu0 1
    %107 = vperm.xlu0 %106, %v28
    %v108 = vpop.permute.xlu0 %107
    %110 = vset.pattern.permute.xlu0 1
    %111 = vperm.xlu0 %110, %v29
    %v112 = vpop.permute.xlu0 %111
    %v114 = vlaneseq
    %v115 = vshrl.u32 %v114, 7
    %v116 = vsub.s32 0, %v115
    %v117 = vrot.slane %v14, %v116
    %v118 = vmul.f32 %v84, %v117
    %v119 = vmul.f32 %v88, %v117
    %v120 = vmul.f32 %v92, %v117
    %v121 = vmul.f32 %v96, %v117
    %v122 = vmul.f32 %v100, %v117
    %v123 = vmul.f32 %v104, %v117
    %v124 = vmul.f32 %v108, %v117
    %v125 = vmul.f32 %v112, %v117
    %v126 = vadd.f32 %v74, %v118
    %v127 = vadd.f32 %v75, %v119
    %v128 = vadd.f32 %v76, %v120
    %v129 = vadd.f32 %v77, %v121
    %v130 = vadd.f32 %v78, %v122
    %v131 = vadd.f32 %v79, %v123
    %v132 = vadd.f32 %v80, %v124
    %v133 = vadd.f32 %v81, %v125
    %v134 = vlaneseq
    %v135 = vshrl.u32 %v134, 7
    %v136 = vsub.s32 0, %v135
    %v137 = vrot.slane %v15, %v136
    %v138 = vadd.f32 %v126, %v137
    %v139 = vadd.f32 %v127, %v137
    %v140 = vadd.f32 %v128, %v137
    %v141 = vadd.f32 %v129, %v137
    %v142 = vadd.f32 %v130, %v137
    %v143 = vadd.f32 %v131, %v137
    %v144 = vadd.f32 %v132, %v137
    %v145 = vadd.f32 %v133, %v137
    %vm146 = vcmask 261120
    %v148 = vsel %vm146, 0, 0
    %150 = vmatprep.subr.bf16.mxu0 0
    %151 = vmatpush1.bf16.msra.mxu0 0
    %152 = vmatprep.subr.bf16.mxu0 0
    %153 = vmatpush1.bf16.msra.mxu0 0
    %154 = vmatprep.subr.bf16.mxu0 0
    %155 = vmatpush1.bf16.msra.mxu0 0
    %156 = vmatprep.subr.bf16.mxu0 0
    %157 = vmatpush1.bf16.msra.mxu0 0
    %158 = vmatprep.subr.bf16.mxu0 0
    %159 = vmatpush1.bf16.msra.mxu0 0
    %160 = vmatprep.subr.bf16.mxu0 0
    %161 = vmatpush1.bf16.msra.mxu0 0
    %162 = vmatprep.subr.bf16.mxu0 0
    %163 = vmatpush1.bf16.msra.mxu0 %v21
    %164 = vmatprep.subr.bf16.mxu0 0
    %165 = vmatpush1.bf16.msra.mxu0 %v20
    %166 = vmatprep.subr.bf16.mxu0 0
    %167 = vmatpush2.bf16.msra.mxu0 0
    %168 = vmatprep.subr.bf16.mxu0 0
    %169 = vmatpush2.bf16.msra.mxu0 0
    %170 = vmatprep.subr.bf16.mxu0 0
    %171 = vmatpush2.bf16.msra.mxu0 0
    %172 = vmatprep.subr.bf16.mxu0 0
    %173 = vmatpush2.bf16.msra.mxu0 0
    %174 = vmatprep.subr.bf16.mxu0 0
    %175 = vmatpush2.bf16.msra.mxu0 0
    %176 = vmatprep.subr.bf16.mxu0 0
    %177 = vmatpush2.bf16.msra.mxu0 0
    %178 = vmatprep.subr.bf16.mxu0 0
    %179 = vmatpush2.bf16.msra.mxu0 0
    %180 = vmatprep.subr.bf16.mxu0 0
    %181 = vmatpush2.bf16.msra.mxu0 0
    %182 = vmatprep.mubr.bf16.mxu0 0
    %183 = vmatmul.mubr.bf16.gmra.mxu0 %v148
    %v184 = vpop.f32.mrf.mxu0
    %v185 = vadd.f32 0.0, %v184
    %v186 = vpop.f32.mrf.mxu0
    %v187 = vpop.f32.mrf.mxu0
    %v188 = vpop.f32.mrf.mxu0
    %189 = vdwg.mxu0
    %v190 = vadd.f32 %v138, %v185
    %v191 = vxor.u32 %v190, 2147483648
    %v192 = vmul.f32 %v191, 1.442695
    %v193 = vpow.pop %v192
    %v194 = vadd.f32 %v193, 1.0
    %v195 = vrcp.pop %v194
    %v196 = vmul.f32 1.0, %v195
    %v197 = vtanh.pop %v190
    %v198 = vmul.f32 %v196, 0.0
    %200 = vrot.lane.b32.xlu0 %v197, 64
    %v201 = vpop.permute.xlu0 %200
    %v203 = vmul.f32 %v196, %v201
    %205 = vrot.lane.b32.xlu0 %v203, 32
    %v206 = vpop.permute.xlu0 %205
    %v208 = vadd.f32 %v198, %v206
    %v209 = vtanh.pop %v208
    %211 = vrot.lane.b32.xlu0 %v209, 64
    %v212 = vpop.permute.xlu0 %211
    %v214 = vmul.f32 %v196, %v212
    %v215 = vpack.c.bf16 %v214, %v214
    %217 = vrot.lane.b32.xlu0 %v215, 32
    %v218 = vpop.permute.xlu0 %217
    %v220 = vsel %vm146, %v218, 0
    %222 = vmatprep.subr.bf16.mxu0 0
    %223 = vmatpush1.bf16.msra.mxu0 0
    %224 = vmatprep.subr.bf16.mxu0 0
    %225 = vmatpush1.bf16.msra.mxu0 0
    %226 = vmatprep.subr.bf16.mxu0 0
    %227 = vmatpush1.bf16.msra.mxu0 0
    %228 = vmatprep.subr.bf16.mxu0 0
    %229 = vmatpush1.bf16.msra.mxu0 0
    %230 = vmatprep.subr.bf16.mxu0 0
    %231 = vmatpush1.bf16.msra.mxu0 0
    %232 = vmatprep.subr.bf16.mxu0 0
    %233 = vmatpush1.bf16.msra.mxu0 0
    %234 = vmatprep.subr.bf16.mxu0 0
    %235 = vmatpush1.bf16.msra.mxu0 %v21
    %236 = vmatprep.subr.bf16.mxu0 0
    %237 = vmatpush1.bf16.msra.mxu0 %v20
    %238 = vmatprep.subr.bf16.mxu0 0
    %239 = vmatpush2.bf16.msra.mxu0 0
    %240 = vmatprep.subr.bf16.mxu0 0
    %241 = vmatpush2.bf16.msra.mxu0 0
    %242 = vmatprep.subr.bf16.mxu0 0
    %243 = vmatpush2.bf16.msra.mxu0 0
    %244 = vmatprep.subr.bf16.mxu0 0
    %245 = vmatpush2.bf16.msra.mxu0 0
    %246 = vmatprep.subr.bf16.mxu0 0
    %247 = vmatpush2.bf16.msra.mxu0 0
    %248 = vmatprep.subr.bf16.mxu0 0
    %249 = vmatpush2.bf16.msra.mxu0 0
    %250 = vmatprep.subr.bf16.mxu0 0
    %251 = vmatpush2.bf16.msra.mxu0 0
    %252 = vmatprep.subr.bf16.mxu0 0
    %253 = vmatpush2.bf16.msra.mxu0 0
    %254 = vmatprep.mubr.bf16.mxu0 0
    %255 = vmatmul.mubr.bf16.gmra.mxu0 %v220
    %v256 = vpop.f32.mrf.mxu0
    %v257 = vadd.f32 0.0, %v256
    %v258 = vpop.f32.mrf.mxu0
    %v259 = vpop.f32.mrf.mxu0
    %v260 = vpop.f32.mrf.mxu0
    %261 = vdwg.mxu0
    %v262 = vadd.f32 %v139, %v257
    %v263 = vxor.u32 %v262, 2147483648
    %v264 = vmul.f32 %v263, 1.442695
    %v265 = vpow.pop %v264
    %v266 = vadd.f32 %v265, 1.0
    %v267 = vrcp.pop %v266
    %v268 = vmul.f32 1.0, %v267
    %v269 = vtanh.pop %v262
    %v270 = vmul.f32 %v268, %v208
    %272 = vrot.lane.b32.xlu0 %v269, 64
    %v273 = vpop.permute.xlu0 %272
    %v275 = vmul.f32 %v268, %v273
    %277 = vrot.lane.b32.xlu0 %v275, 32
    %v278 = vpop.permute.xlu0 %277
    %v280 = vadd.f32 %v270, %v278
    %v281 = vtanh.pop %v280
    %283 = vrot.lane.b32.xlu0 %v281, 64
    %v284 = vpop.permute.xlu0 %283
    %v286 = vmul.f32 %v268, %v284
    %v287 = vpack.c.bf16 %v286, %v286
    %289 = vrot.lane.b32.xlu0 %v287, 32
    %v290 = vpop.permute.xlu0 %289
    %v292 = vsel %vm146, %v290, 0
    %294 = vmatprep.subr.bf16.mxu0 0
    %295 = vmatpush1.bf16.msra.mxu0 0
    %296 = vmatprep.subr.bf16.mxu0 0
    %297 = vmatpush1.bf16.msra.mxu0 0
    %298 = vmatprep.subr.bf16.mxu0 0
    %299 = vmatpush1.bf16.msra.mxu0 0
    %300 = vmatprep.subr.bf16.mxu0 0
    %301 = vmatpush1.bf16.msra.mxu0 0
    %302 = vmatprep.subr.bf16.mxu0 0
    %303 = vmatpush1.bf16.msra.mxu0 0
    %304 = vmatprep.subr.bf16.mxu0 0
    %305 = vmatpush1.bf16.msra.mxu0 0
    %306 = vmatprep.subr.bf16.mxu0 0
    %307 = vmatpush1.bf16.msra.mxu0 %v21
    %308 = vmatprep.subr.bf16.mxu0 0
    %309 = vmatpush1.bf16.msra.mxu0 %v20
    %310 = vmatprep.subr.bf16.mxu0 0
    %311 = vmatpush2.bf16.msra.mxu0 0
    %312 = vmatprep.subr.bf16.mxu0 0
    %313 = vmatpush2.bf16.msra.mxu0 0
    %314 = vmatprep.subr.bf16.mxu0 0
    %315 = vmatpush2.bf16.msra.mxu0 0
    %316 = vmatprep.subr.bf16.mxu0 0
    %317 = vmatpush2.bf16.msra.mxu0 0
    %318 = vmatprep.subr.bf16.mxu0 0
    %319 = vmatpush2.bf16.msra.mxu0 0
    %320 = vmatprep.subr.bf16.mxu0 0
    %321 = vmatpush2.bf16.msra.mxu0 0
    %322 = vmatprep.subr.bf16.mxu0 0
    %323 = vmatpush2.bf16.msra.mxu0 0
    %324 = vmatprep.subr.bf16.mxu0 0
    %325 = vmatpush2.bf16.msra.mxu0 0
    %326 = vmatprep.mubr.bf16.mxu0 0
    %327 = vmatmul.mubr.bf16.gmra.mxu0 %v292
    %v328 = vpop.f32.mrf.mxu0
    %v329 = vadd.f32 0.0, %v328
    %v330 = vpop.f32.mrf.mxu0
    %v331 = vpop.f32.mrf.mxu0
    %v332 = vpop.f32.mrf.mxu0
    %333 = vdwg.mxu0
    %v334 = vadd.f32 %v140, %v329
    %v335 = vxor.u32 %v334, 2147483648
    %v336 = vmul.f32 %v335, 1.442695
    %v337 = vpow.pop %v336
    %v338 = vadd.f32 %v337, 1.0
    %v339 = vrcp.pop %v338
    %v340 = vmul.f32 1.0, %v339
    %v341 = vtanh.pop %v334
    %v342 = vmul.f32 %v340, %v280
    %344 = vrot.lane.b32.xlu0 %v341, 64
    %v345 = vpop.permute.xlu0 %344
    %v347 = vmul.f32 %v340, %v345
    %349 = vrot.lane.b32.xlu0 %v347, 32
    %v350 = vpop.permute.xlu0 %349
    %v352 = vadd.f32 %v342, %v350
    %v353 = vtanh.pop %v352
    %355 = vrot.lane.b32.xlu0 %v353, 64
    %v356 = vpop.permute.xlu0 %355
    %v358 = vmul.f32 %v340, %v356
    %v359 = vpack.c.bf16 %v358, %v358
    %361 = vrot.lane.b32.xlu0 %v359, 32
    %v362 = vpop.permute.xlu0 %361
    %v364 = vsel %vm146, %v362, 0
    %366 = vmatprep.subr.bf16.mxu0 0
    %367 = vmatpush1.bf16.msra.mxu0 0
    %368 = vmatprep.subr.bf16.mxu0 0
    %369 = vmatpush1.bf16.msra.mxu0 0
    %370 = vmatprep.subr.bf16.mxu0 0
    %371 = vmatpush1.bf16.msra.mxu0 0
    %372 = vmatprep.subr.bf16.mxu0 0
    %373 = vmatpush1.bf16.msra.mxu0 0
    %374 = vmatprep.subr.bf16.mxu0 0
    %375 = vmatpush1.bf16.msra.mxu0 0
    %376 = vmatprep.subr.bf16.mxu0 0
    %377 = vmatpush1.bf16.msra.mxu0 0
    %378 = vmatprep.subr.bf16.mxu0 0
    %379 = vmatpush1.bf16.msra.mxu0 %v21
    %380 = vmatprep.subr.bf16.mxu0 0
    %381 = vmatpush1.bf16.msra.mxu0 %v20
    %382 = vmatprep.subr.bf16.mxu0 0
    %383 = vmatpush2.bf16.msra.mxu0 0
    %384 = vmatprep.subr.bf16.mxu0 0
    %385 = vmatpush2.bf16.msra.mxu0 0
    %386 = vmatprep.subr.bf16.mxu0 0
    %387 = vmatpush2.bf16.msra.mxu0 0
    %388 = vmatprep.subr.bf16.mxu0 0
    %389 = vmatpush2.bf16.msra.mxu0 0
    %390 = vmatprep.subr.bf16.mxu0 0
    %391 = vmatpush2.bf16.msra.mxu0 0
    %392 = vmatprep.subr.bf16.mxu0 0
    %393 = vmatpush2.bf16.msra.mxu0 0
    %394 = vmatprep.subr.bf16.mxu0 0
    %395 = vmatpush2.bf16.msra.mxu0 0
    %396 = vmatprep.subr.bf16.mxu0 0
    %397 = vmatpush2.bf16.msra.mxu0 0
    %398 = vmatprep.mubr.bf16.mxu0 0
    %399 = vmatmul.mubr.bf16.gmra.mxu0 %v364
    %v400 = vpop.f32.mrf.mxu0
    %v401 = vadd.f32 0.0, %v400
    %v402 = vpop.f32.mrf.mxu0
    %v403 = vpop.f32.mrf.mxu0
    %v404 = vpop.f32.mrf.mxu0
    %405 = vdwg.mxu0
    %v406 = vadd.f32 %v141, %v401
    %v407 = vxor.u32 %v406, 2147483648
    %v408 = vmul.f32 %v407, 1.442695
    %v409 = vpow.pop %v408
    %v410 = vadd.f32 %v409, 1.0
    %v411 = vrcp.pop %v410
    %v412 = vmul.f32 1.0, %v411
    %v413 = vtanh.pop %v406
    %v414 = vmul.f32 %v412, %v352
    %416 = vrot.lane.b32.xlu0 %v413, 64
    %v417 = vpop.permute.xlu0 %416
    %v419 = vmul.f32 %v412, %v417
    %421 = vrot.lane.b32.xlu0 %v419, 32
    %v422 = vpop.permute.xlu0 %421
    %v424 = vadd.f32 %v414, %v422
    %v425 = vtanh.pop %v424
    %427 = vrot.lane.b32.xlu0 %v425, 64
    %v428 = vpop.permute.xlu0 %427
    %v430 = vmul.f32 %v412, %v428
    %v431 = vpack.c.bf16 %v430, %v430
    %433 = vrot.lane.b32.xlu0 %v431, 32
    %v434 = vpop.permute.xlu0 %433
    %v436 = vsel %vm146, %v434, 0
    %438 = vmatprep.subr.bf16.mxu0 0
    %439 = vmatpush1.bf16.msra.mxu0 0
    %440 = vmatprep.subr.bf16.mxu0 0
    %441 = vmatpush1.bf16.msra.mxu0 0
    %442 = vmatprep.subr.bf16.mxu0 0
    %443 = vmatpush1.bf16.msra.mxu0 0
    %444 = vmatprep.subr.bf16.mxu0 0
    %445 = vmatpush1.bf16.msra.mxu0 0
    %446 = vmatprep.subr.bf16.mxu0 0
    %447 = vmatpush1.bf16.msra.mxu0 0
    %448 = vmatprep.subr.bf16.mxu0 0
    %449 = vmatpush1.bf16.msra.mxu0 0
    %450 = vmatprep.subr.bf16.mxu0 0
    %451 = vmatpush1.bf16.msra.mxu0 %v21
    %452 = vmatprep.subr.bf16.mxu0 0
    %453 = vmatpush1.bf16.msra.mxu0 %v20
    %454 = vmatprep.subr.bf16.mxu0 0
    %455 = vmatpush2.bf16.msra.mxu0 0
    %456 = vmatprep.subr.bf16.mxu0 0
    %457 = vmatpush2.bf16.msra.mxu0 0
    %458 = vmatprep.subr.bf16.mxu0 0
    %459 = vmatpush2.bf16.msra.mxu0 0
    %460 = vmatprep.subr.bf16.mxu0 0
    %461 = vmatpush2.bf16.msra.mxu0 0
    %462 = vmatprep.subr.bf16.mxu0 0
    %463 = vmatpush2.bf16.msra.mxu0 0
    %464 = vmatprep.subr.bf16.mxu0 0
    %465 = vmatpush2.bf16.msra.mxu0 0
    %466 = vmatprep.subr.bf16.mxu0 0
    %467 = vmatpush2.bf16.msra.mxu0 0
    %468 = vmatprep.subr.bf16.mxu0 0
    %469 = vmatpush2.bf16.msra.mxu0 0
    %470 = vmatprep.mubr.bf16.mxu0 0
    %471 = vmatmul.mubr.bf16.gmra.mxu0 %v436
    %v472 = vpop.f32.mrf.mxu0
    %v473 = vadd.f32 0.0, %v472
    %v474 = vpop.f32.mrf.mxu0
    %v475 = vpop.f32.mrf.mxu0
    %v476 = vpop.f32.mrf.mxu0
    %477 = vdwg.mxu0
    %v478 = vadd.f32 %v142, %v473
    %v479 = vxor.u32 %v478, 2147483648
    %v480 = vmul.f32 %v479, 1.442695
    %v481 = vpow.pop %v480
    %v482 = vadd.f32 %v481, 1.0
    %v483 = vrcp.pop %v482
    %v484 = vmul.f32 1.0, %v483
    %v485 = vtanh.pop %v478
    %v486 = vmul.f32 %v484, %v424
    %488 = vrot.lane.b32.xlu0 %v485, 64
    %v489 = vpop.permute.xlu0 %488
    %v491 = vmul.f32 %v484, %v489
    %493 = vrot.lane.b32.xlu0 %v491, 32
    %v494 = vpop.permute.xlu0 %493
    %v496 = vadd.f32 %v486, %v494
    %v497 = vtanh.pop %v496
    %499 = vrot.lane.b32.xlu0 %v497, 64
    %v500 = vpop.permute.xlu0 %499
    %v502 = vmul.f32 %v484, %v500
    %v503 = vpack.c.bf16 %v502, %v502
    %505 = vrot.lane.b32.xlu0 %v503, 32
    %v506 = vpop.permute.xlu0 %505
    %v508 = vsel %vm146, %v506, 0
    %510 = vmatprep.subr.bf16.mxu0 0
    %511 = vmatpush1.bf16.msra.mxu0 0
    %512 = vmatprep.subr.bf16.mxu0 0
    %513 = vmatpush1.bf16.msra.mxu0 0
    %514 = vmatprep.subr.bf16.mxu0 0
    %515 = vmatpush1.bf16.msra.mxu0 0
    %516 = vmatprep.subr.bf16.mxu0 0
    %517 = vmatpush1.bf16.msra.mxu0 0
    %518 = vmatprep.subr.bf16.mxu0 0
    %519 = vmatpush1.bf16.msra.mxu0 0
    %520 = vmatprep.subr.bf16.mxu0 0
    %521 = vmatpush1.bf16.msra.mxu0 0
    %522 = vmatprep.subr.bf16.mxu0 0
    %523 = vmatpush1.bf16.msra.mxu0 %v21
    %524 = vmatprep.subr.bf16.mxu0 0
    %525 = vmatpush1.bf16.msra.mxu0 %v20
    %526 = vmatprep.subr.bf16.mxu0 0
    %527 = vmatpush2.bf16.msra.mxu0 0
    %528 = vmatprep.subr.bf16.mxu0 0
    %529 = vmatpush2.bf16.msra.mxu0 0
    %530 = vmatprep.subr.bf16.mxu0 0
    %531 = vmatpush2.bf16.msra.mxu0 0
    %532 = vmatprep.subr.bf16.mxu0 0
    %533 = vmatpush2.bf16.msra.mxu0 0
    %534 = vmatprep.subr.bf16.mxu0 0
    %535 = vmatpush2.bf16.msra.mxu0 0
    %536 = vmatprep.subr.bf16.mxu0 0
    %537 = vmatpush2.bf16.msra.mxu0 0
    %538 = vmatprep.subr.bf16.mxu0 0
    %539 = vmatpush2.bf16.msra.mxu0 0
    %540 = vmatprep.subr.bf16.mxu0 0
    %541 = vmatpush2.bf16.msra.mxu0 0
    %542 = vmatprep.mubr.bf16.mxu0 0
    %543 = vmatmul.mubr.bf16.gmra.mxu0 %v508
    %v544 = vpop.f32.mrf.mxu0
    %v545 = vadd.f32 0.0, %v544
    %v546 = vpop.f32.mrf.mxu0
    %v547 = vpop.f32.mrf.mxu0
    %v548 = vpop.f32.mrf.mxu0
    %549 = vdwg.mxu0
    %v550 = vadd.f32 %v143, %v545
    %v551 = vxor.u32 %v550, 2147483648
    %v552 = vmul.f32 %v551, 1.442695
    %v553 = vpow.pop %v552
    %v554 = vadd.f32 %v553, 1.0
    %v555 = vrcp.pop %v554
    %v556 = vmul.f32 1.0, %v555
    %v557 = vtanh.pop %v550
    %v558 = vmul.f32 %v556, %v496
    %560 = vrot.lane.b32.xlu0 %v557, 64
    %v561 = vpop.permute.xlu0 %560
    %v563 = vmul.f32 %v556, %v561
    %565 = vrot.lane.b32.xlu0 %v563, 32
    %v566 = vpop.permute.xlu0 %565
    %v568 = vadd.f32 %v558, %v566
    %v569 = vtanh.pop %v568
    %571 = vrot.lane.b32.xlu0 %v569, 64
    %v572 = vpop.permute.xlu0 %571
    %v574 = vmul.f32 %v556, %v572
    %v575 = vpack.c.bf16 %v574, %v574
    %577 = vrot.lane.b32.xlu0 %v575, 32
    %v578 = vpop.permute.xlu0 %577
    %v580 = vsel %vm146, %v578, 0
    %582 = vmatprep.subr.bf16.mxu0 0
    %583 = vmatpush1.bf16.msra.mxu0 0
    %584 = vmatprep.subr.bf16.mxu0 0
    %585 = vmatpush1.bf16.msra.mxu0 0
    %586 = vmatprep.subr.bf16.mxu0 0
    %587 = vmatpush1.bf16.msra.mxu0 0
    %588 = vmatprep.subr.bf16.mxu0 0
    %589 = vmatpush1.bf16.msra.mxu0 0
    %590 = vmatprep.subr.bf16.mxu0 0
    %591 = vmatpush1.bf16.msra.mxu0 0
    %592 = vmatprep.subr.bf16.mxu0 0
    %593 = vmatpush1.bf16.msra.mxu0 0
    %594 = vmatprep.subr.bf16.mxu0 0
    %595 = vmatpush1.bf16.msra.mxu0 %v21
    %596 = vmatprep.subr.bf16.mxu0 0
    %597 = vmatpush1.bf16.msra.mxu0 %v20
    %598 = vmatprep.subr.bf16.mxu0 0
    %599 = vmatpush2.bf16.msra.mxu0 0
    %600 = vmatprep.subr.bf16.mxu0 0
    %601 = vmatpush2.bf16.msra.mxu0 0
    %602 = vmatprep.subr.bf16.mxu0 0
    %603 = vmatpush2.bf16.msra.mxu0 0
    %604 = vmatprep.subr.bf16.mxu0 0
    %605 = vmatpush2.bf16.msra.mxu0 0
    %606 = vmatprep.subr.bf16.mxu0 0
    %607 = vmatpush2.bf16.msra.mxu0 0
    %608 = vmatprep.subr.bf16.mxu0 0
    %609 = vmatpush2.bf16.msra.mxu0 0
    %610 = vmatprep.subr.bf16.mxu0 0
    %611 = vmatpush2.bf16.msra.mxu0 0
    %612 = vmatprep.subr.bf16.mxu0 0
    %613 = vmatpush2.bf16.msra.mxu0 0
    %614 = vmatprep.mubr.bf16.mxu0 0
    %615 = vmatmul.mubr.bf16.gmra.mxu0 %v580
    %v616 = vpop.f32.mrf.mxu0
    %v617 = vadd.f32 0.0, %v616
    %v618 = vpop.f32.mrf.mxu0
    %v619 = vpop.f32.mrf.mxu0
    %v620 = vpop.f32.mrf.mxu0
    %621 = vdwg.mxu0
    %v622 = vadd.f32 %v144, %v617
    %v623 = vxor.u32 %v622, 2147483648
    %v624 = vmul.f32 %v623, 1.442695
    %v625 = vpow.pop %v624
    %v626 = vadd.f32 %v625, 1.0
    %v627 = vrcp.pop %v626
    %v628 = vmul.f32 1.0, %v627
    %v629 = vtanh.pop %v622
    %v630 = vmul.f32 %v628, %v568
    %632 = vrot.lane.b32.xlu0 %v629, 64
    %v633 = vpop.permute.xlu0 %632
    %v635 = vmul.f32 %v628, %v633
    %637 = vrot.lane.b32.xlu0 %v635, 32
    %v638 = vpop.permute.xlu0 %637
    %v640 = vadd.f32 %v630, %v638
    %v641 = vtanh.pop %v640
    %643 = vrot.lane.b32.xlu0 %v641, 64
    %v644 = vpop.permute.xlu0 %643
    %v646 = vmul.f32 %v628, %v644
    %v647 = vpack.c.bf16 %v646, %v646
    %649 = vrot.lane.b32.xlu0 %v647, 32
    %v650 = vpop.permute.xlu0 %649
    %v652 = vsel %vm146, %v650, 0
    %654 = vmatprep.subr.bf16.mxu0 0
    %655 = vmatpush1.bf16.msra.mxu0 0
    %656 = vmatprep.subr.bf16.mxu0 0
    %657 = vmatpush1.bf16.msra.mxu0 0
    %658 = vmatprep.subr.bf16.mxu0 0
    %659 = vmatpush1.bf16.msra.mxu0 0
    %660 = vmatprep.subr.bf16.mxu0 0
    %661 = vmatpush1.bf16.msra.mxu0 0
    %662 = vmatprep.subr.bf16.mxu0 0
    %663 = vmatpush1.bf16.msra.mxu0 0
    %664 = vmatprep.subr.bf16.mxu0 0
    %665 = vmatpush1.bf16.msra.mxu0 0
    %666 = vmatprep.subr.bf16.mxu0 0
    %667 = vmatpush1.bf16.msra.mxu0 %v21
    %668 = vmatprep.subr.bf16.mxu0 0
    %669 = vmatpush1.bf16.msra.mxu0 %v20
    %670 = vmatprep.subr.bf16.mxu0 0
    %671 = vmatpush2.bf16.msra.mxu0 0
    %672 = vmatprep.subr.bf16.mxu0 0
    %673 = vmatpush2.bf16.msra.mxu0 0
    %674 = vmatprep.subr.bf16.mxu0 0
    %675 = vmatpush2.bf16.msra.mxu0 0
    %676 = vmatprep.subr.bf16.mxu0 0
    %677 = vmatpush2.bf16.msra.mxu0 0
    %678 = vmatprep.subr.bf16.mxu0 0
    %679 = vmatpush2.bf16.msra.mxu0 0
    %680 = vmatprep.subr.bf16.mxu0 0
    %681 = vmatpush2.bf16.msra.mxu0 0
    %682 = vmatprep.subr.bf16.mxu0 0
    %683 = vmatpush2.bf16.msra.mxu0 0
    %684 = vmatprep.subr.bf16.mxu0 0
    %685 = vmatpush2.bf16.msra.mxu0 0
    %686 = vmatprep.mubr.bf16.mxu0 0
    %687 = vmatmul.mubr.bf16.gmra.mxu0 %v652
    %v688 = vpop.f32.mrf.mxu0
    %v689 = vadd.f32 0.0, %v688
    %v690 = vpop.f32.mrf.mxu0
    %v691 = vpop.f32.mrf.mxu0
    %v692 = vpop.f32.mrf.mxu0
    %693 = vdwg.mxu0
    %v694 = vadd.f32 %v145, %v689
    %v695 = vxor.u32 %v694, 2147483648
    %v696 = vmul.f32 %v695, 1.442695
    %v697 = vpow.pop %v696
    %v698 = vadd.f32 %v697, 1.0
    %v699 = vrcp.pop %v698
    %v700 = vmul.f32 1.0, %v699
    %v701 = vtanh.pop %v694
    %v702 = vmul.f32 %v700, %v640
    %704 = vrot.lane.b32.xlu0 %v701, 64
    %v705 = vpop.permute.xlu0 %704
    %v707 = vmul.f32 %v700, %v705
    %709 = vrot.lane.b32.xlu0 %v707, 32
    %v710 = vpop.permute.xlu0 %709
    %v712 = vadd.f32 %v702, %v710
    %v713 = vtanh.pop %v712
    %715 = vrot.lane.b32.xlu0 %v713, 64
    %v716 = vpop.permute.xlu0 %715
    %v718 = vmul.f32 %v700, %v716
    %720 = vrot.lane.b32.xlu0 %v718, 32
    %v721 = vpop.permute.xlu0 %720
    %723 = vst.msk [vmem:[#allocation2] sm:$0xff] %vm146, %v721
    // Predicated region
    $region10: #{tpu_custom_call.1} parent=1 // pred_check
      _
    $region11: #{tpu_custom_call.1} parent=1 // pred_check_branch
      %725 = sbr.rel (0) target = $region13
    $region12: #{tpu_custom_call.1} parent=1 // pred_region
      %s727 = ssub.s32 128, 128
      %728 = vsyncadd [#allocation3], %s727
      %s730 = sshll.u32 [#allocation2], 4
      %s731 = int_to_ptr.vmem [resolvable:$true] %s730
      %733 = dma.vmem_to_hbm [thread:$0]  %s731, 128, %s2, [#allocation3]
    $region13: #{tpu_custom_call.1} parent=1 // pred_fallthru
      _
    // Predicated region
    $region14: #{tpu_custom_call.1} parent=1 // pred_check
      _
    $region15: #{tpu_custom_call.1} parent=1 // pred_check_branch
      %735 = sbr.rel (0) target = $region17
    $region16: #{tpu_custom_call.1} parent=1 // pred_region
      %736 = dma.done [#allocation3], 128
    $region17: #{tpu_custom_call.1} parent=1 // pred_fallthru
      _
    %737 = vsyncpa [#allocation3], 1

</llo_original>
